<compile_context>
chip_gen: v7x
topology: tpu7x:2x2x1
jax: 0.10.0
libtpu: 0.0.40
codegen_flags: <defaults>
</compile_context>

<pallas_src>
import jax
import jax.numpy as jnp
from jax.experimental import pallas as pl
from jax.experimental.pallas import tpu as pltpu


# ----------------------------- parameter init ------------------------------
def orthogonal_init(key, rows, cols, gain=1.0, dtype=jnp.float32):
    """Deterministic orthogonal init (same spirit as nn.init.orthogonal_)."""
    n = max(rows, cols)
    a = jax.random.normal(key, (n, n), dtype=jnp.float32)
    q, r = jnp.linalg.qr(a)
    d = jnp.diagonal(r)
    q = q * jnp.where(d == 0, 1.0, jnp.sign(d))[None, :]
    return (gain * q[:rows, :cols]).astype(dtype)


# --------------------------------- kernel ----------------------------------
def timevec_kernel(x_ref, w2_ref, b2_ref, o_ref):
    # x_ref : [TB, N, H] VMEM, native dtype (f32 or bf16)
    # w2_ref: [N]        SMEM f32  (layer_2 weight)
    # b2_ref: [1]        SMEM f32  (layer_2 bias)
    # o_ref : [TB, H]    VMEM f32
    num = x_ref.shape[1]  # static, small -> fully unrolled fused MAC over N
    acc = x_ref[:, 0, :].astype(jnp.float32) * w2_ref[0]
    for n in range(1, num):
        acc = acc + x_ref[:, n, :].astype(jnp.float32) * w2_ref[n]
    acc = acc + b2_ref[0]
    o_ref[...] = jnp.maximum(acc, 0.0).astype(o_ref.dtype)  # ReLU


# -------------------------------- wrapper -----------------------------------
def _pick_batch_tile(batch, num, hidden, x_itemsize,
                     budget_bytes=20 * 1024 * 1024):
    """Largest multiple-of-8 batch tile that divides B and whose double-buffered
    input + output tiles fit comfortably under the v7x 32 MiB scoped VMEM."""
    def fits(tb):
        x_tile = tb * num * hidden * x_itemsize
        o_tile = tb * hidden * 4
        return 2 * (x_tile + o_tile) <= budget_bytes

    for tb in (2048, 1024, 512, 256, 128, 64, 32, 16, 8):
        if tb <= batch and batch % tb == 0 and fits(tb):
            return tb
    return batch  # small batches: single block (trivially fits VMEM)


def timevec_feature_net(x, w2, b2, hidden_size):
    """
    x : [batch, num, vector_length], f32 or bf16 (DMA'd in native dtype),
        vector_length must equal hidden_size.
    w2: [1, num]  (PyTorch Linear(num, 1) weight layout)
    b2: [1]
    returns [batch, hidden_size] float32
    """
    B, N, H = x.shape
    assert H == hidden_size, "view(batch, hidden) requires vector_length == hidden_size"

    x_itemsize = jnp.dtype(x.dtype).itemsize
    tb = _pick_batch_tile(B, N, H, x_itemsize)
    grid = (B // tb,)

    w2_k = jnp.reshape(w2, (N,)).astype(jnp.float32)   # SMEM scalar weights
    b2_k = jnp.reshape(b2, (1,)).astype(jnp.float32)   # SMEM scalar bias

    # Advisory cost hint so XLA can overlap the custom call with neighbors.
    cost = pl.CostEstimate(
        flops=2 * B * N * H,
        transcendentals=0,
        bytes_accessed=B * N * H * x_itemsize + B * H * 4 + N * 4 + 4,
    )

    # TODO(synk): if H << 128 and B*H is large, a lane-dense [N, B*H] layout
    # would avoid masked partial stores; skipped here (extra wrapper transpose).
    return pl.pallas_call(
        timevec_kernel,
        out_shape=jax.ShapeDtypeStruct((B, H), jnp.float32),
        grid_spec=pltpu.PrefetchScalarGridSpec(
            num_scalar_prefetch=0,
            grid=grid,
            in_specs=[
                pl.BlockSpec((tb, N, H), lambda b: (b, 0, 0)),   # batch-tiled x
                pl.BlockSpec(memory_space=pltpu.SMEM),           # w2 (N,) scalars
                pl.BlockSpec(memory_space=pltpu.SMEM),           # b2 scalar
            ],
            out_specs=pl.BlockSpec((tb, H), lambda b: (b, 0)),
        ),
        compiler_params=pltpu.CompilerParams(
            dimension_semantics=("parallel",),        # pipelined; 2-TC shard on v7x
            vmem_limit_bytes=32 * 1024 * 1024,        # safe on v5e/v6e/v7x
        ),
        cost_estimate=cost,
    )(x, w2_k, b2_k)   # NOTE: no wrapper upcast -- x goes in its native dtype


# --------------------------------- main -------------------------------------
if __name__ == "__main__":
    # Small shapes consistent with the module:
    #   batch=2, num (sequence count)=8, vector_length=hidden_size=32
    batch, num, hidden = 2, 8, 32
    input_shape = hidden  # vector length

    key = jax.random.PRNGKey(0)
    k_x, k_w1, k_w2 = jax.random.split(key, 3)

    # layer_1 params: initialized for parity with __init__, unused in forward.
    w1 = orthogonal_init(k_w1, hidden, input_shape)
    b1 = jnp.zeros((hidden,), jnp.float32)
    del w1, b1  # TODO(synk): layer_1 is dead code in the PyTorch forward.

    # layer_2 = Linear(num, 1): weight [1, num], bias [1]
    w2 = orthogonal_init(k_w2, 1, num)
    b2 = jnp.zeros((1,), jnp.float32)

    # input: [batch, num, vector_length]
    x = jax.random.normal(k_x, (batch, num, hidden), dtype=jnp.float32)

    # --- f32 path ---
    out = timevec_feature_net(x, w2, b2, hidden)
    out = jax.block_until_ready(out)
    ref = jnp.maximum(jnp.einsum("bnh,n->bh", x, w2[0]) + b2[0], 0.0)
    assert out.shape == (batch, hidden)
    assert jnp.allclose(out, ref, atol=1e-5, rtol=1e-5)

    # --- bf16 path (native-dtype DMA, f32 math inside the kernel) ---
    x_bf16 = x.astype(jnp.bfloat16)
    out_bf = timevec_feature_net(x_bf16, w2, b2, hidden)
    out_bf = jax.block_until_ready(out_bf)
    ref_bf = jnp.maximum(
        jnp.einsum("bnh,n->bh", x_bf16.astype(jnp.float32), w2[0]) + b2[0], 0.0)
    assert jnp.allclose(out_bf, ref_bf, atol=1e-3, rtol=1e-3)

    print("KERNEL_OK")
</pallas_src>

<mosaic_0001>
module attributes {stable_mosaic.version = 11 : i64} {
  func.func @timevec_kernel(%arg0: i32, %arg1: memref<2x8x32xf32, #tpu.memory_space<vmem>>, %arg2: memref<8xf32, #tpu.memory_space<smem>>, %arg3: memref<1xf32, #tpu.memory_space<smem>>, %arg4: memref<2x32xf32, #tpu.memory_space<vmem>>) attributes {dimension_semantics = [#tpu.dimension_semantics<parallel>], iteration_bounds = array<i64: 1>, scalar_prefetch = 0 : i64, scratch_operands = 0 : i64, tpu.core_type = #tpu.core_type<tc>, window_params = [{transform_indices = @transform_0, window_bounds = array<i64: 2, 8, 32>}, {transform_indices = @transform_1, window_bounds = array<i64: 8>}, {transform_indices = @transform_2, window_bounds = array<i64: 1>}, {transform_indices = @transform_3, window_bounds = array<i64: 2, 32>}]} {
    %c0 = arith.constant 0 : index
    %c0_0 = arith.constant 0 : index
    %c0_1 = arith.constant 0 : index
    %0 = vector.load %arg1[%c0, %c0_0, %c0_1] : memref<2x8x32xf32, #tpu.memory_space<vmem>>, vector<2x1x32xf32>
    %1 = vector.shape_cast %0 : vector<2x1x32xf32> to vector<2x32xf32>
    %c0_2 = arith.constant 0 : index
    %2 = memref.load %arg2[%c0_2] : memref<8xf32, #tpu.memory_space<smem>>
    %3 = vector.broadcast %2 : f32 to vector<2x32xf32>
    %4 = arith.mulf %1, %3 : vector<2x32xf32>
    %c0_3 = arith.constant 0 : index
    %c1 = arith.constant 1 : index
    %c0_4 = arith.constant 0 : index
    %5 = vector.load %arg1[%c0_3, %c1, %c0_4] : memref<2x8x32xf32, #tpu.memory_space<vmem>>, vector<2x1x32xf32>
    %6 = vector.shape_cast %5 : vector<2x1x32xf32> to vector<2x32xf32>
    %c1_5 = arith.constant 1 : index
    %7 = memref.load %arg2[%c1_5] : memref<8xf32, #tpu.memory_space<smem>>
    %8 = vector.broadcast %7 : f32 to vector<2x32xf32>
    %9 = arith.mulf %6, %8 : vector<2x32xf32>
    %10 = arith.addf %4, %9 : vector<2x32xf32>
    %c0_6 = arith.constant 0 : index
    %c2 = arith.constant 2 : index
    %c0_7 = arith.constant 0 : index
    %11 = vector.load %arg1[%c0_6, %c2, %c0_7] : memref<2x8x32xf32, #tpu.memory_space<vmem>>, vector<2x1x32xf32>
    %12 = vector.shape_cast %11 : vector<2x1x32xf32> to vector<2x32xf32>
    %c2_8 = arith.constant 2 : index
    %13 = memref.load %arg2[%c2_8] : memref<8xf32, #tpu.memory_space<smem>>
    %14 = vector.broadcast %13 : f32 to vector<2x32xf32>
    %15 = arith.mulf %12, %14 : vector<2x32xf32>
    %16 = arith.addf %10, %15 : vector<2x32xf32>
    %c0_9 = arith.constant 0 : index
    %c3 = arith.constant 3 : index
    %c0_10 = arith.constant 0 : index
    %17 = vector.load %arg1[%c0_9, %c3, %c0_10] : memref<2x8x32xf32, #tpu.memory_space<vmem>>, vector<2x1x32xf32>
    %18 = vector.shape_cast %17 : vector<2x1x32xf32> to vector<2x32xf32>
    %c3_11 = arith.constant 3 : index
    %19 = memref.load %arg2[%c3_11] : memref<8xf32, #tpu.memory_space<smem>>
    %20 = vector.broadcast %19 : f32 to vector<2x32xf32>
    %21 = arith.mulf %18, %20 : vector<2x32xf32>
    %22 = arith.addf %16, %21 : vector<2x32xf32>
    %c0_12 = arith.constant 0 : index
    %c4 = arith.constant 4 : index
    %c0_13 = arith.constant 0 : index
    %23 = vector.load %arg1[%c0_12, %c4, %c0_13] : memref<2x8x32xf32, #tpu.memory_space<vmem>>, vector<2x1x32xf32>
    %24 = vector.shape_cast %23 : vector<2x1x32xf32> to vector<2x32xf32>
    %c4_14 = arith.constant 4 : index
    %25 = memref.load %arg2[%c4_14] : memref<8xf32, #tpu.memory_space<smem>>
    %26 = vector.broadcast %25 : f32 to vector<2x32xf32>
    %27 = arith.mulf %24, %26 : vector<2x32xf32>
    %28 = arith.addf %22, %27 : vector<2x32xf32>
    %c0_15 = arith.constant 0 : index
    %c5 = arith.constant 5 : index
    %c0_16 = arith.constant 0 : index
    %29 = vector.load %arg1[%c0_15, %c5, %c0_16] : memref<2x8x32xf32, #tpu.memory_space<vmem>>, vector<2x1x32xf32>
    %30 = vector.shape_cast %29 : vector<2x1x32xf32> to vector<2x32xf32>
    %c5_17 = arith.constant 5 : index
    %31 = memref.load %arg2[%c5_17] : memref<8xf32, #tpu.memory_space<smem>>
    %32 = vector.broadcast %31 : f32 to vector<2x32xf32>
    %33 = arith.mulf %30, %32 : vector<2x32xf32>
    %34 = arith.addf %28, %33 : vector<2x32xf32>
    %c0_18 = arith.constant 0 : index
    %c6 = arith.constant 6 : index
    %c0_19 = arith.constant 0 : index
    %35 = vector.load %arg1[%c0_18, %c6, %c0_19] : memref<2x8x32xf32, #tpu.memory_space<vmem>>, vector<2x1x32xf32>
    %36 = vector.shape_cast %35 : vector<2x1x32xf32> to vector<2x32xf32>
    %c6_20 = arith.constant 6 : index
    %37 = memref.load %arg2[%c6_20] : memref<8xf32, #tpu.memory_space<smem>>
    %38 = vector.broadcast %37 : f32 to vector<2x32xf32>
    %39 = arith.mulf %36, %38 : vector<2x32xf32>
    %40 = arith.addf %34, %39 : vector<2x32xf32>
    %c0_21 = arith.constant 0 : index
    %c7 = arith.constant 7 : index
    %c0_22 = arith.constant 0 : index
    %41 = vector.load %arg1[%c0_21, %c7, %c0_22] : memref<2x8x32xf32, #tpu.memory_space<vmem>>, vector<2x1x32xf32>
    %42 = vector.shape_cast %41 : vector<2x1x32xf32> to vector<2x32xf32>
    %c7_23 = arith.constant 7 : index
    %43 = memref.load %arg2[%c7_23] : memref<8xf32, #tpu.memory_space<smem>>
    %44 = vector.broadcast %43 : f32 to vector<2x32xf32>
    %45 = arith.mulf %42, %44 : vector<2x32xf32>
    %46 = arith.addf %40, %45 : vector<2x32xf32>
    %c0_24 = arith.constant 0 : index
    %47 = memref.load %arg3[%c0_24] : memref<1xf32, #tpu.memory_space<smem>>
    %48 = vector.broadcast %47 : f32 to vector<2x32xf32>
    %49 = arith.addf %46, %48 : vector<2x32xf32>
    %cst = arith.constant 0.000000e+00 : f32
    %50 = vector.broadcast %cst : f32 to vector<2x32xf32>
    %51 = arith.maximumf %49, %50 : vector<2x32xf32>
    %c0_25 = arith.constant 0 : index
    %c0_26 = arith.constant 0 : index
    %52 = vector.load %arg4[%c0_25, %c0_26] : memref<2x32xf32, #tpu.memory_space<vmem>>, vector<2x32xf32>
    tpu.vector_store %arg4[%c0_25, %c0_26], %51 {strides = array<i32>} : memref<2x32xf32, #tpu.memory_space<vmem>>, vector<2x32xf32>,
    return
  }
  func.func @transform_0(%arg0: i32) -> (i32, i32, i32) {
    %c0_i32 = arith.constant 0 : i32
    %c0_i32_0 = arith.constant 0 : i32
    %c0_i32_1 = arith.constant 0 : i32
    return %arg0, %c0_i32, %c0_i32_0 : i32, i32, i32
  }
  func.func @transform_1(%arg0: i32) -> i32 {
    %c0_i32 = arith.constant 0 : i32
    %c0_i32_0 = arith.constant 0 : i32
    return %c0_i32 : i32
  }
  func.func @transform_2(%arg0: i32) -> i32 {
    %c0_i32 = arith.constant 0 : i32
    %c0_i32_0 = arith.constant 0 : i32
    return %c0_i32 : i32
  }
  func.func @transform_3(%arg0: i32) -> (i32, i32) {
    %c0_i32 = arith.constant 0 : i32
    %c0_i32_0 = arith.constant 0 : i32
    return %arg0, %c0_i32 : i32, i32
  }
}

</mosaic_0001>

<llo_original>
// kernel: tpu_custom_call.1
$region0: #{tpu_custom_call.1}
  #allocation0 [shape = 'u32[]', space=smem, size = 0x4, offset = 0x4, fixed_abs, tag = 'smem constant byte address 0x4 - core index']
  #allocation1 [shape = 'u32[144,128]{1,0:T(1,128)}', space=vmem, size = 0x12000, scoped, tag = 'internal scratch']
  #allocation2 [shape = 'f32[1]{0:T(128)S(6)}', space=smem, size = 0x200, scoped, tag = 'scoped memory for tpu_custom_call.1']
  %s0 = inlined_call_operand.hbm [shape: f32[2,8,32], index: 0, kind: input, shape index: {}]
  %s1 = inlined_call_operand.vmem [shape: f32[8], index: 1, kind: input, shape index: {}]
  %s2 = inlined_call_operand.<no memory space> [shape: f32[1], index: 2, kind: input, shape index: {}]
  %s3 = inlined_call_operand.hbm [shape: f32[2,32], index: 3, kind: output, shape index: {}]
  %s4 = sld [smem:[#allocation0]]
  $region30: #{tpu_custom_call.1} parent=0
    _
  %s6 = ssub.s32 1, %s4
  %s7 = scalar_select 0, %s6, %s4
  %8 = sst [smem:[#allocation2]] %s2
  $region1: #{tpu_custom_call.1} parent=0
    #allocation3 [shape = 'u8[8192]{0}', space=vmem, size = 0x2000, scoped, tag = 'input window, operand 0, single buffered']
    #allocation4 [shape = 's32[1]{0}', space=sflag, size = 0x4, scoped, tag = 'scoped memory for tpu_custom_call.1']
    #allocation5 [shape = 's32[1]{0}', space=sflag, size = 0x4, scoped, tag = 'scoped memory for tpu_custom_call.1']
    #allocation6 [shape = 's32[1]{0}', space=sflag, size = 0x4, scoped, tag = 'scoped memory for tpu_custom_call.1']
    #allocation7 [shape = 'u8[512]{0}', space=smem, size = 0x200, scoped, tag = 'input window, operand 1, single buffered']
    #allocation8 [shape = 'u8[1024]{0}', space=vmem, size = 0x400, scoped, tag = 'output window, operand 0, single buffered']
    %9 = vsyncpa [#allocation4], 0
    %10 = vsyncpa [#allocation6], 0
    %11 = vsyncpa [#allocation5], 0
    // Predicated region
    $region2: #{tpu_custom_call.1} parent=1 // pred_check
      _
    $region3: #{tpu_custom_call.1} parent=1 // pred_check_branch
      %13 = sbr.rel (0) target = $region5
    $region4: #{tpu_custom_call.1} parent=1 // pred_region
      %s15 = ssub.s32 256, 256
      %16 = vsyncadd [#allocation4], %s15
      %s17 = sshll.u32 [#allocation3], 4
      %s18 = int_to_ptr.vmem [resolvable:$true] %s17
      %23 = dma.hbm_to_vmem [thread:$0]  %s0, 256, %s18, [#allocation4], 128, 128, 8
    $region5: #{tpu_custom_call.1} parent=1 // pred_fallthru
      _
    // Predicated region
    $region6: #{tpu_custom_call.1} parent=1 // pred_check
      _
    $region7: #{tpu_custom_call.1} parent=1 // pred_check_branch
      %25 = sbr.rel (0) target = $region9
    $region8: #{tpu_custom_call.1} parent=1 // pred_region
      %s27 = ssub.s32 16, 16
      %28 = vsyncadd [#allocation6], %s27
      %s30 = sshll.u32 %s1, 4
      %s31 = int_to_ptr.vmem [resolvable:$true] %s30
      %33 = dma.vmem_to_smem %s31, 16, [#allocation7], [#allocation6]
    $region9: #{tpu_custom_call.1} parent=1 // pred_fallthru
      _
    // Predicated region
    $region10: #{tpu_custom_call.1} parent=1 // pred_check
      _
    $region11: #{tpu_custom_call.1} parent=1 // pred_check_branch
      %35 = sbr.rel (0) target = $region13
    $region12: #{tpu_custom_call.1} parent=1 // pred_region
      _
    $region13: #{tpu_custom_call.1} parent=1 // pred_fallthru
      _
    // Predicated region
    $region14: #{tpu_custom_call.1} parent=1 // pred_check
      _
    $region15: #{tpu_custom_call.1} parent=1 // pred_check_branch
      %37 = sbr.rel (0) target = $region17
    $region16: #{tpu_custom_call.1} parent=1 // pred_region
      %38 = dma.done [#allocation4], 256
    $region17: #{tpu_custom_call.1} parent=1 // pred_fallthru
      _
    // Predicated region
    $region18: #{tpu_custom_call.1} parent=1 // pred_check
      _
    $region19: #{tpu_custom_call.1} parent=1 // pred_check_branch
      %40 = sbr.rel (0) target = $region21
    $region20: #{tpu_custom_call.1} parent=1 // pred_region
      %41 = dma.done [#allocation6], 16
    $region21: #{tpu_custom_call.1} parent=1 // pred_fallthru
      _
    %42 = sfence
    %v43 = vld [vmem:[#allocation3] sm:$0x1]
    %v44 = vld [vmem:[#allocation3 + $0x8] sm:$0x1]
    %s45 = sld [smem:[#allocation7]]
    %v46 = vstv %s45
    %v47 = vmul.f32 %v43, %v46
    %v48 = vmul.f32 %v44, %v46
    %v49 = vld [vmem:[#allocation3 + $0x1] sm:$0x1]
    %v50 = vld [vmem:[#allocation3 + $0x9] sm:$0x1]
    %s51 = sld [smem:[#allocation7 + $0x1]]
    %v52 = vstv %s51
    %v53 = vmul.f32 %v49, %v52
    %v54 = vmul.f32 %v50, %v52
    %v55 = vadd.f32 %v47, %v53
    %v56 = vadd.f32 %v48, %v54
    %v57 = vld [vmem:[#allocation3 + $0x2] sm:$0x1]
    %v58 = vld [vmem:[#allocation3 + $0xa] sm:$0x1]
    %s59 = sld [smem:[#allocation7 + $0x2]]
    %v60 = vstv %s59
    %v61 = vmul.f32 %v57, %v60
    %v62 = vmul.f32 %v58, %v60
    %v63 = vadd.f32 %v55, %v61
    %v64 = vadd.f32 %v56, %v62
    %v65 = vld [vmem:[#allocation3 + $0x3] sm:$0x1]
    %v66 = vld [vmem:[#allocation3 + $0xb] sm:$0x1]
    %s67 = sld [smem:[#allocation7 + $0x3]]
    %v68 = vstv %s67
    %v69 = vmul.f32 %v65, %v68
    %v70 = vmul.f32 %v66, %v68
    %v71 = vadd.f32 %v63, %v69
    %v72 = vadd.f32 %v64, %v70
    %v73 = vld [vmem:[#allocation3 + $0x4] sm:$0x1]
    %v74 = vld [vmem:[#allocation3 + $0xc] sm:$0x1]
    %s75 = sld [smem:[#allocation7 + $0x4]]
    %v76 = vstv %s75
    %v77 = vmul.f32 %v73, %v76
    %v78 = vmul.f32 %v74, %v76
    %v79 = vadd.f32 %v71, %v77
    %v80 = vadd.f32 %v72, %v78
    %v81 = vld [vmem:[#allocation3 + $0x5] sm:$0x1]
    %v82 = vld [vmem:[#allocation3 + $0xd] sm:$0x1]
    %s83 = sld [smem:[#allocation7 + $0x5]]
    %v84 = vstv %s83
    %v85 = vmul.f32 %v81, %v84
    %v86 = vmul.f32 %v82, %v84
    %v87 = vadd.f32 %v79, %v85
    %v88 = vadd.f32 %v80, %v86
    %v89 = vld [vmem:[#allocation3 + $0x6] sm:$0x1]
    %v90 = vld [vmem:[#allocation3 + $0xe] sm:$0x1]
    %s91 = sld [smem:[#allocation7 + $0x6]]
    %v92 = vstv %s91
    %v93 = vmul.f32 %v89, %v92
    %v94 = vmul.f32 %v90, %v92
    %v95 = vadd.f32 %v87, %v93
    %v96 = vadd.f32 %v88, %v94
    %v97 = vld [vmem:[#allocation3 + $0x7] sm:$0x1]
    %v98 = vld [vmem:[#allocation3 + $0xf] sm:$0x1]
    %s99 = sld [smem:[#allocation7 + $0x7]]
    %v100 = vstv %s99
    %v101 = vmul.f32 %v97, %v100
    %v102 = vmul.f32 %v98, %v100
    %v103 = vadd.f32 %v95, %v101
    %v104 = vadd.f32 %v96, %v102
    %s105 = sld [smem:[#allocation2]]
    %v106 = vstv %s105
    %v107 = vadd.f32 %v103, %v106
    %v108 = vadd.f32 %v104, %v106
    %v109 = vmax.f32 %v107, 0.0
    %v110 = vmax.f32 %v108, 0.0
    %v113 = vrot.slane %v110, 7
    %vm114 = vcmask 1041409
    %v115 = vsel %vm114, %v113, %v109
    %vm117 = vcmask 254976
    %118 = vst.msk [vmem:[#allocation8] sm:$0x3] %vm117, %v115
    // Predicated region
    $region22: #{tpu_custom_call.1} parent=1 // pred_check
      _
    $region23: #{tpu_custom_call.1} parent=1 // pred_check_branch
      %120 = sbr.rel (0) target = $region25
    $region24: #{tpu_custom_call.1} parent=1 // pred_region
      %s122 = ssub.s32 32, 32
      %123 = vsyncadd [#allocation5], %s122
      %s125 = sshll.u32 [#allocation8], 4
      %s126 = int_to_ptr.vmem [resolvable:$true] %s125
      %128 = dma.vmem_to_hbm [thread:$0]  %s126, 32, %s3, [#allocation5]
    $region25: #{tpu_custom_call.1} parent=1 // pred_fallthru
      _
    // Predicated region
    $region26: #{tpu_custom_call.1} parent=1 // pred_check
      _
    $region27: #{tpu_custom_call.1} parent=1 // pred_check_branch
      %130 = sbr.rel (0) target = $region29
    $region28: #{tpu_custom_call.1} parent=1 // pred_region
      %131 = dma.done [#allocation5], 32
    $region29: #{tpu_custom_call.1} parent=1 // pred_fallthru
      _
    %132 = vsyncpa [#allocation4], 1
    %133 = vsyncpa [#allocation5], 1
    %134 = vsyncpa [#allocation6], 1

</llo_original>
